<compile_context>
chip_gen: v5e
topology: v5e:2x2
jax: 0.10.0
libtpu: 0.0.40
codegen_flags: <defaults>
</compile_context>

<pallas_src>
import functools

import jax
import jax.numpy as jnp
from jax import lax
from jax.experimental import pallas as pl
from jax.experimental.pallas import tpu as pltpu

NEG_ENC = -10000.0   # HF-style additive attention mask / tgt_mask constant
NEG_MEM = -1e9       # memory_key_padding_mask (acts like -inf on padded source tokens)
NEG_BIG = -1e30      # online-LSE initial running max / padded-vocab column mask


# ----------------------------- small in-kernel helpers -----------------------------

def _softmax(x):
    m = jnp.max(x, axis=-1, keepdims=True)
    e = jnp.exp(x - m)
    return e * pl.reciprocal(jnp.sum(e, axis=-1, keepdims=True), approx=True)


def _dot(a, b):
    return jnp.dot(a, b, preferred_element_type=jnp.float32)


def _dot_t(a, b):
    # a @ b.T with both contracting dims last (MXU-friendly), f32 accumulation
    return lax.dot_general(a, b, (((1,), (1,)), ((), ())),
                           preferred_element_type=jnp.float32)


def _bmm_qk(q, k):   # (B, Q, D) x (B, K, D) -> (B, Q, K)
    return jnp.einsum('bqd,bkd->bqk', q, k, preferred_element_type=jnp.float32)


def _bmm_pv(p, v):   # (B, Q, K) x (B, K, D) -> (B, Q, D)
    return jnp.einsum('bqk,bkd->bqd', p, v, preferred_element_type=jnp.float32)


def _compiler_params(semantics, block_bytes):
    # Explicit VMEM budget: ~2x block footprint (double buffering) + headroom,
    # capped < 48 MiB so it also leaves pipeline headroom on the 64 MiB v7x part.
    need = 3 * int(block_bytes) + (8 << 20)
    return pltpu.CompilerParams(
        dimension_semantics=semantics,
        vmem_limit_bytes=int(min(max(need, 16 << 20), 48 << 20)),
    )


# ----------------------------------- kernels ---------------------------------------

def _encdec_kernel(src_ref, tgt_ref, smask_ref,
                   enc_wqkv_ref, dec_wqkv1_ref, dec_wq2_ref, dec_wkv2_ref, dec_wo_ref,
                   attn_ref, dec_ref, *, scale):
    bb, s, h = src_ref.shape
    t = tgt_ref.shape[1]

    src = src_ref[...]                                    # (bb, S, H)
    tgt = tgt_ref[...]                                    # (bb, T, H)
    mask = smask_ref[...]                                 # (bb, 1, S) in {0,1}
    enc_bias = NEG_ENC * (1.0 - mask)                     # encoder additive mask
    mem_bias = NEG_MEM * (1.0 - mask)                     # memory_key_padding_mask

    # ---- encoder self-attention: fused QKV projection, M = bb*S ----
    qkv = _dot(src.reshape(bb * s, h), enc_wqkv_ref[...]).reshape(bb, s, 3 * h)
    q, k, v = qkv[..., :h], qkv[..., h:2 * h], qkv[..., 2 * h:]
    p = _softmax(_bmm_qk(q, k) * scale + enc_bias)        # (bb, S, S)
    attn_ref[...] = p.astype(attn_ref.dtype)
    enc_out = src + _bmm_pv(p, v)                         # residual

    # ---- decoder masked self-attention: tgt_mask = -10000 * (1 - tril) ----
    qkv1 = _dot(tgt.reshape(bb * t, h), dec_wqkv1_ref[...]).reshape(bb, t, 3 * h)
    q1, k1, v1 = qkv1[..., :h], qkv1[..., h:2 * h], qkv1[..., 2 * h:]
    rows = lax.broadcasted_iota(jnp.int32, (t, t), 0)
    cols = lax.broadcasted_iota(jnp.int32, (t, t), 1)
    causal = jnp.where(rows >= cols, 0.0, NEG_ENC).astype(jnp.float32)
    p1 = _softmax(_bmm_qk(q1, k1) * scale + causal)       # (bb, T, T)
    x = tgt + _bmm_pv(p1, v1)

    # ---- decoder cross-attention with memory_key_padding_mask (= ~source_mask) ----
    q2 = _dot(x.reshape(bb * t, h), dec_wq2_ref[...]).reshape(bb, t, h)
    kv2 = _dot(enc_out.reshape(bb * s, h), dec_wkv2_ref[...]).reshape(bb, s, 2 * h)
    k2, v2 = kv2[..., :h], kv2[..., h:]
    p2 = _softmax(_bmm_qk(q2, k2) * scale + mem_bias)     # (bb, T, S)
    x2 = x + _bmm_pv(p2, v2)

    dec_ref[...] = _dot(x2.reshape(bb * t, h),
                        dec_wo_ref[...]).reshape(bb, t, h).astype(dec_ref.dtype)


def _head_ce_kernel(dec_ref, wd_ref, bd_ref, emb_ref, labels_ref, active_ref,
                    part_ref, hid_ref, m_ref, l_ref, pick_ref,
                    *, tv, v_real, mask_tail):
    vi = pl.program_id(1)
    nv = pl.num_programs(1)

    @pl.when(vi == 0)
    def _():
        # hidden = tanh(dense(dec)) computed ONCE per row tile, reused across vocab tiles
        hid_ref[...] = jnp.tanh(_dot_t(dec_ref[...], wd_ref[...]) + bd_ref[...])
        m_ref[...] = jnp.full(m_ref.shape, NEG_BIG, m_ref.dtype)
        l_ref[...] = jnp.zeros_like(l_ref)
        pick_ref[...] = jnp.zeros_like(pick_ref)

    h = hid_ref[...]                                      # (tn, H)
    logits = _dot_t(h, emb_ref[...])                      # (tn, tv) tied lm_head tile
    cols = lax.broadcasted_iota(jnp.int32, logits.shape, 1) + vi * tv
    if mask_tail:                                         # padded vocab columns
        logits = jnp.where(cols < v_real, logits, NEG_BIG)

    labels = labels_ref[...]                              # (tn, 1) int32
    pick_ref[...] += jnp.sum(jnp.where(cols == labels, logits, 0.0),
                             axis=-1, keepdims=True)

    # online log-sum-exp across vocab tiles
    m_prev = m_ref[...]
    m_new = jnp.maximum(m_prev, jnp.max(logits, axis=-1, keepdims=True))
    l_ref[...] = (jnp.exp(m_prev - m_new) * l_ref[...]
                  + jnp.sum(jnp.exp(logits - m_new), axis=-1, keepdims=True))
    m_ref[...] = m_new

    @pl.when(vi == nv - 1)
    def _():
        lse = m_ref[...] + jnp.log(l_ref[...])            # (tn, 1)
        nll = lse - pick_ref[...]
        active = active_ref[...]
        valid = jnp.where(labels_ref[...] == -1, 0.0, 1.0) * active  # ignore_index=-1
        lsum = jnp.sum(nll * valid)
        vcnt = jnp.sum(valid)
        acnt = jnp.sum(active)
        lanes = lax.broadcasted_iota(jnp.int32, (1, 128), 1)
        part_ref[0] = (jnp.where(lanes == 0, lsum, 0.0)
                       + jnp.where(lanes == 1, vcnt, 0.0)
                       + jnp.where(lanes == 2, acnt, 0.0))


# ---------------------------------- wrappers ----------------------------------------

def encoder_decoder_forward(src_emb, tgt_emb, source_mask, params, *, bb=None):
    b, s, h = src_emb.shape
    t = tgt_emb.shape[1]
    if bb is None:
        # batch several sequences per grid step so matmul M (= bb*S / bb*T) fills the MXU
        target = max(1, -(-128 // max(s, t)))
        bb = 1
        for d in range(1, b + 1):
            if b % d == 0 and d <= target:
                bb = d
    assert b % bb == 0

    smask_f = source_mask.astype(jnp.float32).reshape(b, 1, s)
    enc_wqkv = jnp.concatenate([params["enc_wq"], params["enc_wk"], params["enc_wv"]], axis=1)
    dec_wqkv1 = jnp.concatenate([params["dec_wq1"], params["dec_wk1"], params["dec_wv1"]], axis=1)
    dec_wkv2 = jnp.concatenate([params["dec_wk2"], params["dec_wv2"]], axis=1)
    kern = functools.partial(_encdec_kernel, scale=1.0 / float(h) ** 0.5)

    block_bytes = 4 * (bb * s * h + bb * t * h + bb * s
                       + 3 * h * h + 3 * h * h + h * h + 2 * h * h + h * h
                       + bb * s * s + bb * t * h)

    attn, dec_out = pl.pallas_call(
        kern,
        grid=(b // bb,),
        in_specs=[
            pl.BlockSpec((bb, s, h), lambda i: (i, 0, 0)),
            pl.BlockSpec((bb, t, h), lambda i: (i, 0, 0)),
            pl.BlockSpec((bb, 1, s), lambda i: (i, 0, 0)),
            pl.BlockSpec((h, 3 * h), lambda i: (0, 0)),
            pl.BlockSpec((h, 3 * h), lambda i: (0, 0)),
            pl.BlockSpec((h, h), lambda i: (0, 0)),
            pl.BlockSpec((h, 2 * h), lambda i: (0, 0)),
            pl.BlockSpec((h, h), lambda i: (0, 0)),
        ],
        out_specs=[
            pl.BlockSpec((bb, s, s), lambda i: (i, 0, 0)),
            pl.BlockSpec((bb, t, h), lambda i: (i, 0, 0)),
        ],
        out_shape=[
            jax.ShapeDtypeStruct((b, s, s), jnp.float32),
            jax.ShapeDtypeStruct((b, t, h), jnp.float32),
        ],
        compiler_params=_compiler_params(("parallel",), block_bytes),
    )(src_emb, tgt_emb, smask_f, enc_wqkv, dec_wqkv1,
      params["dec_wq2"], dec_wkv2, params["dec_wo"])
    return attn, dec_out


def fused_head_ce(dec_shift, labels, active, wd, bd, emb, *, tn=None, tv=None):
    """hidden = tanh(dec @ Wd^T + b); logits = hidden @ E^T (tied);
    masked shifted CE with ignore_index=-1 — logits never hit HBM."""
    n, h = dec_shift.shape
    v = emb.shape[0]
    if tn is None:
        tn = 8 if n <= 256 else 128          # row tile (multiple of 8 sublanes)
    if tv is None:
        tv = 32 if v <= 512 else 512         # vocab tile (keeps (tv,H) blocks VMEM-bounded)
    n_pad = ((n + tn - 1) // tn) * tn
    v_pad = ((v + tv - 1) // tv) * tv

    dec_p = jnp.pad(dec_shift.astype(jnp.float32), ((0, n_pad - n), (0, 0)))
    labels_p = jnp.pad(labels.astype(jnp.int32), (0, n_pad - n),
                       constant_values=-1).reshape(n_pad, 1)
    active_p = jnp.pad(active.astype(jnp.float32), (0, n_pad - n)).reshape(n_pad, 1)
    emb_p = emb if v_pad == v else jnp.pad(emb, ((0, v_pad - v), (0, 0)))

    r, nv = n_pad // tn, v_pad // tv
    kern = functools.partial(_head_ce_kernel, tv=tv, v_real=v, mask_tail=(v_pad != v))

    block_bytes = 4 * (tn * h + h * h + h + tv * h + 2 * tn + 128 + tn * h + 3 * tn)

    parts = pl.pallas_call(
        kern,
        grid=(r, nv),                                      # vocab (reduction) axis last
        in_specs=[
            pl.BlockSpec((tn, h), lambda i, j: (i, 0)),    # dec rows
            pl.BlockSpec((h, h), lambda i, j: (0, 0)),     # dense weight
            pl.BlockSpec((1, h), lambda i, j: (0, 0)),     # dense bias
            pl.BlockSpec((tv, h), lambda i, j: (j, 0)),    # tied embedding, vocab-tiled
            pl.BlockSpec((tn, 1), lambda i, j: (i, 0)),    # labels
            pl.BlockSpec((tn, 1), lambda i, j: (i, 0)),    # active mask
        ],
        out_specs=pl.BlockSpec((1, 1, 128), lambda i, j: (i, 0, 0)),
        out_shape=jax.ShapeDtypeStruct((r, 1, 128), jnp.float32),
        scratch_shapes=[
            pltpu.VMEM((tn, h), jnp.float32),              # hidden (computed once / row tile)
            pltpu.VMEM((tn, 1), jnp.float32),              # running max
            pltpu.VMEM((tn, 1), jnp.float32),              # running sum-exp
            pltpu.VMEM((tn, 1), jnp.float32),              # picked logit
        ],
        compiler_params=_compiler_params(("parallel", "arbitrary"), block_bytes),
    )(dec_p, wd, bd, emb_p, labels_p, active_p)

    loss_sum = jnp.sum(parts[:, 0, 0])
    valid_cnt = jnp.sum(parts[:, 0, 1])
    active_cnt = jnp.sum(parts[:, 0, 2])
    return loss_sum, valid_cnt, active_cnt


# --------------------------- full forward (training branch) -------------------------

def seq2seq_with_sl_forward(params, source_ids, source_mask, target_ids, target_mask):
    E = params["emb"]                                      # (V, H), tied with lm_head
    b, s = source_ids.shape
    t = target_ids.shape[1]
    v, h = E.shape

    # encoder(source_ids, attention_mask=source_mask) + decoder(...), fused per batch group
    src_emb = jnp.take(E, source_ids, axis=0)              # (B, S, H)
    tgt_emb = jnp.take(E, target_ids, axis=0)              # (B, T, H)
    enc_attn, dec_out = encoder_decoder_forward(src_emb, tgt_emb, source_mask, params)

    # fused head (tanh(dense) + tied lm_head) + shifted masked cross-entropy:
    # the (B, T, V) logits are never written to HBM.
    n = b * (t - 1)
    dec_shift = dec_out[:, :t - 1, :].reshape(n, h)
    labels = target_ids[:, 1:].reshape(n).astype(jnp.int32)
    active = (target_mask[:, 1:] != 0).reshape(n).astype(jnp.float32)
    loss_sum, valid_cnt, active_cnt = fused_head_ce(
        dec_shift, labels, active, params["wd"], params["bd"], E)

    loss = loss_sum / jnp.maximum(valid_cnt, 1.0)
    struc_loss = jnp.float32(0.0)                          # sl_feats is None path
    return loss, struc_loss, loss * active_cnt, active_cnt, enc_attn


# -------------------------------------- main ----------------------------------------

if __name__ == "__main__":
    B, S, T, H, V = 2, 16, 8, 32, 64

    key = jax.random.PRNGKey(0)
    ks = jax.random.split(key, 16)
    init = lambda k, shape: 0.02 * jax.random.normal(k, shape, jnp.float32)

    params = {
        "emb":     init(ks[0], (V, H)),     # encoder.embeddings.word_embeddings (tied lm_head)
        "enc_wq":  init(ks[1], (H, H)),
        "enc_wk":  init(ks[2], (H, H)),
        "enc_wv":  init(ks[3], (H, H)),
        "dec_wq1": init(ks[4], (H, H)),
        "dec_wk1": init(ks[5], (H, H)),
        "dec_wv1": init(ks[6], (H, H)),
        "dec_wq2": init(ks[7], (H, H)),
        "dec_wk2": init(ks[8], (H, H)),
        "dec_wv2": init(ks[9], (H, H)),
        "dec_wo":  init(ks[10], (H, H)),
        "wd":      init(ks[11], (H, H)),    # self.dense weight (used as x @ W^T + b)
        "bd":      init(ks[12], (1, H)),    # self.dense bias
    }

    source_ids = jax.random.randint(ks[13], (B, S), 0, V, dtype=jnp.int32)
    target_ids = jax.random.randint(ks[14], (B, T), 0, V, dtype=jnp.int32)
    src_lens = jnp.array([S, S - 4], jnp.int32)
    tgt_lens = jnp.array([T, T - 2], jnp.int32)
    source_mask = (jnp.arange(S)[None, :] < src_lens[:, None]).astype(jnp.int32)
    target_mask = (jnp.arange(T)[None, :] < tgt_lens[:, None]).astype(jnp.int32)

    outputs = seq2seq_with_sl_forward(params, source_ids, source_mask, target_ids, target_mask)
    outputs = jax.block_until_ready(outputs)
    loss, struc_loss, weighted_loss, active_sum, enc_attn = outputs

    assert loss.shape == () and struc_loss.shape == () and active_sum.shape == ()
    assert enc_attn.shape == (B, S, S)
    assert bool(jnp.isfinite(loss)) and bool(jnp.isfinite(weighted_loss))
    print("KERNEL_OK")
</pallas_src>

<mosaic_0001>
module attributes {stable_mosaic.version = 11 : i64} {
  func.func @_encdec_kernel(%arg0: i32, %arg1: memref<2x16x32xf32, #tpu.memory_space<vmem>>, %arg2: memref<2x8x32xf32, #tpu.memory_space<vmem>>, %arg3: memref<2x1x16xf32, #tpu.memory_space<vmem>>, %arg4: memref<32x96xf32, #tpu.memory_space<vmem>>, %arg5: memref<32x96xf32, #tpu.memory_space<vmem>>, %arg6: memref<32x32xf32, #tpu.memory_space<vmem>>, %arg7: memref<32x64xf32, #tpu.memory_space<vmem>>, %arg8: memref<32x32xf32, #tpu.memory_space<vmem>>, %arg9: memref<2x16x16xf32, #tpu.memory_space<vmem>>, %arg10: memref<2x8x32xf32, #tpu.memory_space<vmem>>) attributes {dimension_semantics = [#tpu.dimension_semantics<parallel>], iteration_bounds = array<i64: 1>, scalar_prefetch = 0 : i64, scratch_operands = 0 : i64, tpu.core_type = #tpu.core_type<tc>, window_params = [{transform_indices = @transform_0, window_bounds = array<i64: 2, 16, 32>}, {transform_indices = @transform_1, window_bounds = array<i64: 2, 8, 32>}, {transform_indices = @transform_2, window_bounds = array<i64: 2, 1, 16>}, {pipeline_mode = #tpu.pipeline_mode<synchronous>, transform_indices = @transform_3, window_bounds = array<i64: 32, 96>}, {pipeline_mode = #tpu.pipeline_mode<synchronous>, transform_indices = @transform_4, window_bounds = array<i64: 32, 96>}, {pipeline_mode = #tpu.pipeline_mode<synchronous>, transform_indices = @transform_5, window_bounds = array<i64: 32, 32>}, {pipeline_mode = #tpu.pipeline_mode<synchronous>, transform_indices = @transform_6, window_bounds = array<i64: 32, 64>}, {pipeline_mode = #tpu.pipeline_mode<synchronous>, transform_indices = @transform_7, window_bounds = array<i64: 32, 32>}, {transform_indices = @transform_8, window_bounds = array<i64: 2, 16, 16>}, {transform_indices = @transform_9, window_bounds = array<i64: 2, 8, 32>}]} {
    %c0 = arith.constant 0 : index
    %c0_0 = arith.constant 0 : index
    %c0_1 = arith.constant 0 : index
    %0 = vector.load %arg1[%c0, %c0_0, %c0_1] : memref<2x16x32xf32, #tpu.memory_space<vmem>>, vector<2x16x32xf32>
    %c0_2 = arith.constant 0 : index
    %c0_3 = arith.constant 0 : index
    %c0_4 = arith.constant 0 : index
    %1 = vector.load %arg2[%c0_2, %c0_3, %c0_4] : memref<2x8x32xf32, #tpu.memory_space<vmem>>, vector<2x8x32xf32>
    %c0_5 = arith.constant 0 : index
    %c0_6 = arith.constant 0 : index
    %c0_7 = arith.constant 0 : index
    %2 = vector.load %arg3[%c0_5, %c0_6, %c0_7] : memref<2x1x16xf32, #tpu.memory_space<vmem>>, vector<2x1x16xf32>
    %cst = arith.constant 1.000000e+00 : f32
    %3 = vector.broadcast %cst : f32 to vector<2x1x16xf32>
    %4 = arith.subf %3, %2 : vector<2x1x16xf32>
    %cst_8 = arith.constant -1.000000e+04 : f32
    %5 = vector.broadcast %cst_8 : f32 to vector<2x1x16xf32>
    %6 = arith.mulf %5, %4 : vector<2x1x16xf32>
    %cst_9 = arith.constant 1.000000e+00 : f32
    %7 = vector.broadcast %cst_9 : f32 to vector<2x1x16xf32>
    %8 = arith.subf %7, %2 : vector<2x1x16xf32>
    %cst_10 = arith.constant -1.000000e+09 : f32
    %9 = vector.broadcast %cst_10 : f32 to vector<2x1x16xf32>
    %10 = arith.mulf %9, %8 : vector<2x1x16xf32>
    %11 = vector.shape_cast %0 : vector<2x16x32xf32> to vector<32x32xf32>
    %c0_11 = arith.constant 0 : index
    %c0_12 = arith.constant 0 : index
    %12 = vector.load %arg4[%c0_11, %c0_12] : memref<32x96xf32, #tpu.memory_space<vmem>>, vector<32x96xf32>
    %cst_13 = arith.constant dense<0.000000e+00> : vector<32x96xf32>
    %13 = tpu.matmul %11, %12, %cst_13 {dimension_numbers = #tpu.dot_dimension_numbers<[1], [0], [0], [1], [0, 0, 1, 1], [], []>} : vector<32x32xf32>, vector<32x96xf32>, vector<32x96xf32> -> vector<32x96xf32>
    %14 = vector.shape_cast %13 : vector<32x96xf32> to vector<2x16x96xf32>
    %15 = vector.extract_strided_slice %14 {offsets = [0, 0, 0], sizes = [2, 16, 32], strides = [1, 1, 1]} : vector<2x16x96xf32> to vector<2x16x32xf32>
    %16 = vector.extract_strided_slice %14 {offsets = [0, 0, 32], sizes = [2, 16, 32], strides = [1, 1, 1]} : vector<2x16x96xf32> to vector<2x16x32xf32>
    %17 = vector.extract_strided_slice %14 {offsets = [0, 0, 64], sizes = [2, 16, 32], strides = [1, 1, 1]} : vector<2x16x96xf32> to vector<2x16x32xf32>
    "tpu.trace_start"() <{level = 10 : i32, message = "bqd,bkd->bqk"}> : () -> ()
    %cst_14 = arith.constant dense<0.000000e+00> : vector<2x16x16xf32>
    %18 = tpu.matmul %15, %16, %cst_14 {dimension_numbers = #tpu.dot_dimension_numbers<[2], [2], [1], [1], [0, 0, 0, 1, 1, 1], [0], [0]>} : vector<2x16x32xf32>, vector<2x16x32xf32>, vector<2x16x16xf32> -> vector<2x16x16xf32>
    "tpu.trace_stop"() : () -> ()
    %cst_15 = arith.constant 0.176776692 : f32
    %19 = vector.broadcast %cst_15 : f32 to vector<2x16x16xf32>
    %20 = arith.mulf %18, %19 : vector<2x16x16xf32>
    %21 = vector.broadcast %6 : vector<2x1x16xf32> to vector<2x16x16xf32>
    %22 = arith.addf %20, %21 : vector<2x16x16xf32>
    %cst_16 = arith.constant dense<0xFF800000> : vector<2x16xf32>
    %23 = vector.multi_reduction <maximumf>, %22, %cst_16 [2] : vector<2x16x16xf32> to vector<2x16xf32>
    %24 = vector.shape_cast %23 : vector<2x16xf32> to vector<2x16x1xf32>
    %25 = vector.broadcast %24 : vector<2x16x1xf32> to vector<2x16x16xf32>
    %26 = arith.subf %22, %25 : vector<2x16x16xf32>
    %27 = math.exp %26 : vector<2x16x16xf32>
    %cst_17 = arith.constant dense<0.000000e+00> : vector<2x16xf32>
    %28 = vector.multi_reduction <add>, %27, %cst_17 [2] : vector<2x16x16xf32> to vector<2x16xf32>
    %29 = vector.shape_cast %28 : vector<2x16xf32> to vector<2x16x1xf32>
    %30 = tpu.reciprocal %29 {approx = true} : vector<2x16x1xf32> -> vector<2x16x1xf32>
    %31 = vector.broadcast %30 : vector<2x16x1xf32> to vector<2x16x16xf32>
    %32 = arith.mulf %27, %31 : vector<2x16x16xf32>
    %c0_18 = arith.constant 0 : index
    %c0_19 = arith.constant 0 : index
    %c0_20 = arith.constant 0 : index
    %33 = vector.load %arg9[%c0_18, %c0_19, %c0_20] : memref<2x16x16xf32, #tpu.memory_space<vmem>>, vector<2x16x16xf32>
    tpu.vector_store %arg9[%c0_18, %c0_19, %c0_20], %32 {strides = array<i32>} : memref<2x16x16xf32, #tpu.memory_space<vmem>>, vector<2x16x16xf32>,
    "tpu.trace_start"() <{level = 10 : i32, message = "bqk,bkd->bqd"}> : () -> ()
    %cst_21 = arith.constant dense<0.000000e+00> : vector<2x16x32xf32>
    %34 = tpu.matmul %32, %17, %cst_21 {dimension_numbers = #tpu.dot_dimension_numbers<[2], [1], [1], [2], [0, 0, 0, 1, 1, 2], [0], [0]>} : vector<2x16x16xf32>, vector<2x16x32xf32>, vector<2x16x32xf32> -> vector<2x16x32xf32>
    "tpu.trace_stop"() : () -> ()
    %35 = arith.addf %0, %34 : vector<2x16x32xf32>
    %36 = vector.shape_cast %1 : vector<2x8x32xf32> to vector<16x32xf32>
    %c0_22 = arith.constant 0 : index
    %c0_23 = arith.constant 0 : index
    %37 = vector.load %arg5[%c0_22, %c0_23] : memref<32x96xf32, #tpu.memory_space<vmem>>, vector<32x96xf32>
    %cst_24 = arith.constant dense<0.000000e+00> : vector<16x96xf32>
    %38 = tpu.matmul %36, %37, %cst_24 {dimension_numbers = #tpu.dot_dimension_numbers<[1], [0], [0], [1], [0, 0, 1, 1], [], []>} : vector<16x32xf32>, vector<32x96xf32>, vector<16x96xf32> -> vector<16x96xf32>
    %39 = vector.shape_cast %38 : vector<16x96xf32> to vector<2x8x96xf32>
    %40 = vector.extract_strided_slice %39 {offsets = [0, 0, 0], sizes = [2, 8, 32], strides = [1, 1, 1]} : vector<2x8x96xf32> to vector<2x8x32xf32>
    %41 = vector.extract_strided_slice %39 {offsets = [0, 0, 32], sizes = [2, 8, 32], strides = [1, 1, 1]} : vector<2x8x96xf32> to vector<2x8x32xf32>
    %42 = vector.extract_strided_slice %39 {offsets = [0, 0, 64], sizes = [2, 8, 32], strides = [1, 1, 1]} : vector<2x8x96xf32> to vector<2x8x32xf32>
    %43 = tpu.iota {dimensions = array<i32: 0>} : vector<8x8xi32>
    %44 = tpu.iota {dimensions = array<i32: 1>} : vector<8x8xi32>
    %45 = arith.cmpi sge, %43, %44 : vector<8x8xi32>
    %cst_25 = arith.constant 0.000000e+00 : f32
    %cst_26 = arith.constant -1.000000e+04 : f32
    %46 = vector.broadcast %cst_25 : f32 to vector<8x8xf32>
    %47 = vector.broadcast %cst_26 : f32 to vector<8x8xf32>
    %48 = arith.select %45, %46, %47 : vector<8x8xi1>, vector<8x8xf32>
    "tpu.trace_start"() <{level = 10 : i32, message = "bqd,bkd->bqk"}> : () -> ()
    %cst_27 = arith.constant dense<0.000000e+00> : vector<2x8x8xf32>
    %49 = tpu.matmul %40, %41, %cst_27 {dimension_numbers = #tpu.dot_dimension_numbers<[2], [2], [1], [1], [0, 0, 0, 1, 1, 1], [0], [0]>} : vector<2x8x32xf32>, vector<2x8x32xf32>, vector<2x8x8xf32> -> vector<2x8x8xf32>
    "tpu.trace_stop"() : () -> ()
    %cst_28 = arith.constant 0.176776692 : f32
    %50 = vector.broadcast %cst_28 : f32 to vector<2x8x8xf32>
    %51 = arith.mulf %49, %50 : vector<2x8x8xf32>
    %52 = vector.shape_cast %48 : vector<8x8xf32> to vector<1x8x8xf32>
    %53 = vector.broadcast %52 : vector<1x8x8xf32> to vector<2x8x8xf32>
    %54 = arith.addf %51, %53 : vector<2x8x8xf32>
    %cst_29 = arith.constant dense<0xFF800000> : vector<2x8xf32>
    %55 = vector.multi_reduction <maximumf>, %54, %cst_29 [2] : vector<2x8x8xf32> to vector<2x8xf32>
    %56 = vector.shape_cast %55 : vector<2x8xf32> to vector<2x8x1xf32>
    %57 = vector.broadcast %56 : vector<2x8x1xf32> to vector<2x8x8xf32>
    %58 = arith.subf %54, %57 : vector<2x8x8xf32>
    %59 = math.exp %58 : vector<2x8x8xf32>
    %cst_30 = arith.constant dense<0.000000e+00> : vector<2x8xf32>
    %60 = vector.multi_reduction <add>, %59, %cst_30 [2] : vector<2x8x8xf32> to vector<2x8xf32>
    %61 = vector.shape_cast %60 : vector<2x8xf32> to vector<2x8x1xf32>
    %62 = tpu.reciprocal %61 {approx = true} : vector<2x8x1xf32> -> vector<2x8x1xf32>
    %63 = vector.broadcast %62 : vector<2x8x1xf32> to vector<2x8x8xf32>
    %64 = arith.mulf %59, %63 : vector<2x8x8xf32>
    "tpu.trace_start"() <{level = 10 : i32, message = "bqk,bkd->bqd"}> : () -> ()
    %cst_31 = arith.constant dense<0.000000e+00> : vector<2x8x32xf32>
    %65 = tpu.matmul %64, %42, %cst_31 {dimension_numbers = #tpu.dot_dimension_numbers<[2], [1], [1], [2], [0, 0, 0, 1, 1, 2], [0], [0]>} : vector<2x8x8xf32>, vector<2x8x32xf32>, vector<2x8x32xf32> -> vector<2x8x32xf32>
    "tpu.trace_stop"() : () -> ()
    %66 = arith.addf %1, %65 : vector<2x8x32xf32>
    %67 = vector.shape_cast %66 : vector<2x8x32xf32> to vector<16x32xf32>
    %c0_32 = arith.constant 0 : index
    %c0_33 = arith.constant 0 : index
    %68 = vector.load %arg6[%c0_32, %c0_33] : memref<32x32xf32, #tpu.memory_space<vmem>>, vector<32x32xf32>
    %cst_34 = arith.constant dense<0.000000e+00> : vector<16x32xf32>
    %69 = tpu.matmul %67, %68, %cst_34 {dimension_numbers = #tpu.dot_dimension_numbers<[1], [0], [0], [1], [0, 0, 1, 1], [], []>} : vector<16x32xf32>, vector<32x32xf32>, vector<16x32xf32> -> vector<16x32xf32>
    %70 = vector.shape_cast %69 : vector<16x32xf32> to vector<2x8x32xf32>
    %71 = vector.shape_cast %35 : vector<2x16x32xf32> to vector<32x32xf32>
    %c0_35 = arith.constant 0 : index
    %c0_36 = arith.constant 0 : index
    %72 = vector.load %arg7[%c0_35, %c0_36] : memref<32x64xf32, #tpu.memory_space<vmem>>, vector<32x64xf32>
    %cst_37 = arith.constant dense<0.000000e+00> : vector<32x64xf32>
    %73 = tpu.matmul %71, %72, %cst_37 {dimension_numbers = #tpu.dot_dimension_numbers<[1], [0], [0], [1], [0, 0, 1, 1], [], []>} : vector<32x32xf32>, vector<32x64xf32>, vector<32x64xf32> -> vector<32x64xf32>
    %74 = vector.shape_cast %73 : vector<32x64xf32> to vector<2x16x64xf32>
    %75 = vector.extract_strided_slice %74 {offsets = [0, 0, 0], sizes = [2, 16, 32], strides = [1, 1, 1]} : vector<2x16x64xf32> to vector<2x16x32xf32>
    %76 = vector.extract_strided_slice %74 {offsets = [0, 0, 32], sizes = [2, 16, 32], strides = [1, 1, 1]} : vector<2x16x64xf32> to vector<2x16x32xf32>
    "tpu.trace_start"() <{level = 10 : i32, message = "bqd,bkd->bqk"}> : () -> ()
    %cst_38 = arith.constant dense<0.000000e+00> : vector<2x8x16xf32>
    %77 = tpu.matmul %70, %75, %cst_38 {dimension_numbers = #tpu.dot_dimension_numbers<[2], [2], [1], [1], [0, 0, 0, 1, 1, 1], [0], [0]>} : vector<2x8x32xf32>, vector<2x16x32xf32>, vector<2x8x16xf32> -> vector<2x8x16xf32>
    "tpu.trace_stop"() : () -> ()
    %cst_39 = arith.constant 0.176776692 : f32
    %78 = vector.broadcast %cst_39 : f32 to vector<2x8x16xf32>
    %79 = arith.mulf %77, %78 : vector<2x8x16xf32>
    %80 = vector.broadcast %10 : vector<2x1x16xf32> to vector<2x8x16xf32>
    %81 = arith.addf %79, %80 : vector<2x8x16xf32>
    %cst_40 = arith.constant dense<0xFF800000> : vector<2x8xf32>
    %82 = vector.multi_reduction <maximumf>, %81, %cst_40 [2] : vector<2x8x16xf32> to vector<2x8xf32>
    %83 = vector.shape_cast %82 : vector<2x8xf32> to vector<2x8x1xf32>
    %84 = vector.broadcast %83 : vector<2x8x1xf32> to vector<2x8x16xf32>
    %85 = arith.subf %81, %84 : vector<2x8x16xf32>
    %86 = math.exp %85 : vector<2x8x16xf32>
    %cst_41 = arith.constant dense<0.000000e+00> : vector<2x8xf32>
    %87 = vector.multi_reduction <add>, %86, %cst_41 [2] : vector<2x8x16xf32> to vector<2x8xf32>
    %88 = vector.shape_cast %87 : vector<2x8xf32> to vector<2x8x1xf32>
    %89 = tpu.reciprocal %88 {approx = true} : vector<2x8x1xf32> -> vector<2x8x1xf32>
    %90 = vector.broadcast %89 : vector<2x8x1xf32> to vector<2x8x16xf32>
    %91 = arith.mulf %86, %90 : vector<2x8x16xf32>
    "tpu.trace_start"() <{level = 10 : i32, message = "bqk,bkd->bqd"}> : () -> ()
    %cst_42 = arith.constant dense<0.000000e+00> : vector<2x8x32xf32>
    %92 = tpu.matmul %91, %76, %cst_42 {dimension_numbers = #tpu.dot_dimension_numbers<[2], [1], [1], [2], [0, 0, 0, 1, 1, 2], [0], [0]>} : vector<2x8x16xf32>, vector<2x16x32xf32>, vector<2x8x32xf32> -> vector<2x8x32xf32>
    "tpu.trace_stop"() : () -> ()
    %93 = arith.addf %66, %92 : vector<2x8x32xf32>
    %94 = vector.shape_cast %93 : vector<2x8x32xf32> to vector<16x32xf32>
    %c0_43 = arith.constant 0 : index
    %c0_44 = arith.constant 0 : index
    %95 = vector.load %arg8[%c0_43, %c0_44] : memref<32x32xf32, #tpu.memory_space<vmem>>, vector<32x32xf32>
    %cst_45 = arith.constant dense<0.000000e+00> : vector<16x32xf32>
    %96 = tpu.matmul %94, %95, %cst_45 {dimension_numbers = #tpu.dot_dimension_numbers<[1], [0], [0], [1], [0, 0, 1, 1], [], []>} : vector<16x32xf32>, vector<32x32xf32>, vector<16x32xf32> -> vector<16x32xf32>
    %97 = vector.shape_cast %96 : vector<16x32xf32> to vector<2x8x32xf32>
    %c0_46 = arith.constant 0 : index
    %c0_47 = arith.constant 0 : index
    %c0_48 = arith.constant 0 : index
    %98 = vector.load %arg10[%c0_46, %c0_47, %c0_48] : memref<2x8x32xf32, #tpu.memory_space<vmem>>, vector<2x8x32xf32>
    tpu.vector_store %arg10[%c0_46, %c0_47, %c0_48], %97 {strides = array<i32>} : memref<2x8x32xf32, #tpu.memory_space<vmem>>, vector<2x8x32xf32>,
    return
  }
  func.func @transform_0(%arg0: i32) -> (i32, i32, i32) {
    %c0_i32 = arith.constant 0 : i32
    %c0_i32_0 = arith.constant 0 : i32
    %c0_i32_1 = arith.constant 0 : i32
    return %arg0, %c0_i32, %c0_i32_0 : i32, i32, i32
  }
  func.func @transform_1(%arg0: i32) -> (i32, i32, i32) {
    %c0_i32 = arith.constant 0 : i32
    %c0_i32_0 = arith.constant 0 : i32
    %c0_i32_1 = arith.constant 0 : i32
    return %arg0, %c0_i32, %c0_i32_0 : i32, i32, i32
  }
  func.func @transform_2(%arg0: i32) -> (i32, i32, i32) {
    %c0_i32 = arith.constant 0 : i32
    %c0_i32_0 = arith.constant 0 : i32
    %c0_i32_1 = arith.constant 0 : i32
    return %arg0, %c0_i32, %c0_i32_0 : i32, i32, i32
  }
  func.func @transform_3(%arg0: i32) -> (i32, i32) {
    %c0_i32 = arith.constant 0 : i32
    %c0_i32_0 = arith.constant 0 : i32
    %c0_i32_1 = arith.constant 0 : i32
    return %c0_i32, %c0_i32_0 : i32, i32
  }
  func.func @transform_4(%arg0: i32) -> (i32, i32) {
    %c0_i32 = arith.constant 0 : i32
    %c0_i32_0 = arith.constant 0 : i32
    %c0_i32_1 = arith.constant 0 : i32
    return %c0_i32, %c0_i32_0 : i32, i32
  }
  func.func @transform_5(%arg0: i32) -> (i32, i32) {
    %c0_i32 = arith.constant 0 : i32
    %c0_i32_0 = arith.constant 0 : i32
    %c0_i32_1 = arith.constant 0 : i32
    return %c0_i32, %c0_i32_0 : i32, i32
  }
  func.func @transform_6(%arg0: i32) -> (i32, i32) {
    %c0_i32 = arith.constant 0 : i32
    %c0_i32_0 = arith.constant 0 : i32
    %c0_i32_1 = arith.constant 0 : i32
    return %c0_i32, %c0_i32_0 : i32, i32
  }
  func.func @transform_7(%arg0: i32) -> (i32, i32) {
    %c0_i32 = arith.constant 0 : i32
    %c0_i32_0 = arith.constant 0 : i32
    %c0_i32_1 = arith.constant 0 : i32
    return %c0_i32, %c0_i32_0 : i32, i32
  }
  func.func @transform_8(%arg0: i32) -> (i32, i32, i32) {
    %c0_i32 = arith.constant 0 : i32
    %c0_i32_0 = arith.constant 0 : i32
    %c0_i32_1 = arith.constant 0 : i32
    return %arg0, %c0_i32, %c0_i32_0 : i32, i32, i32
  }
  func.func @transform_9(%arg0: i32) -> (i32, i32, i32) {
    %c0_i32 = arith.constant 0 : i32
    %c0_i32_0 = arith.constant 0 : i32
    %c0_i32_1 = arith.constant 0 : i32
    return %arg0, %c0_i32, %c0_i32_0 : i32, i32, i32
  }
}

</mosaic_0001>

<llo_original>
// kernel: tpu_custom_call.1
$region0: #{tpu_custom_call.1}
  #allocation0 [shape = 'u32[]', space=smem, size = 0x4, offset = 0x4, fixed_abs, tag = 'smem constant byte address 0x4 - core index']
  #allocation1 [shape = 'u32[72,128]{1,0:T(1,128)}', space=vmem, size = 0x9000, scoped, tag = 'internal scratch']
  %s0 = inlined_call_operand.hbm [shape: f32[2,16,32], index: 0, kind: input, shape index: {}]
  %s1 = inlined_call_operand.hbm [shape: f32[2,8,32], index: 1, kind: input, shape index: {}]
  %s2 = inlined_call_operand.hbm [shape: f32[2,1,16], index: 2, kind: input, shape index: {}]
  %s3 = inlined_call_operand.hbm [shape: f32[32,96], index: 3, kind: input, shape index: {}]
  %s4 = inlined_call_operand.hbm [shape: f32[32,96], index: 4, kind: input, shape index: {}]
  %s5 = inlined_call_operand.hbm [shape: f32[32,32], index: 5, kind: input, shape index: {}]
  %s6 = inlined_call_operand.hbm [shape: f32[32,64], index: 6, kind: input, shape index: {}]
  %s7 = inlined_call_operand.hbm [shape: f32[32,32], index: 7, kind: input, shape index: {}]
  %s8 = inlined_call_operand.hbm [shape: f32[2,16,16], index: 8, kind: output, shape index: {0}]
  %s9 = inlined_call_operand.hbm [shape: f32[2,8,32], index: 9, kind: output, shape index: {1}]
  %10 = xla_tuple %s8, %s9
  %s11 = sld [smem:[#allocation0]]
  $region82: #{tpu_custom_call.1} parent=0
    _
  %s13 = ssub.s32 1, %s11
  %s14 = scalar_select 0, %s13, %s11
  $region1: #{tpu_custom_call.1} parent=0
    #allocation2 [shape = 'u8[16384]{0}', space=vmem, size = 0x4000, scoped, tag = 'input window, operand 0, single buffered']
    #allocation3 [shape = 's32[1]{0}', space=sflag, size = 0x4, scoped, tag = 'scoped memory for tpu_custom_call.1']
    #allocation4 [shape = 's32[1]{0}', space=sflag, size = 0x4, scoped, tag = 'scoped memory for tpu_custom_call.1']
    #allocation5 [shape = 'u8[8192]{0}', space=vmem, size = 0x2000, scoped, tag = 'input window, operand 1, single buffered']
    #allocation6 [shape = 's32[1]{0}', space=sflag, size = 0x4, scoped, tag = 'scoped memory for tpu_custom_call.1']
    #allocation7 [shape = 'u8[1024]{0}', space=vmem, size = 0x400, scoped, tag = 'input window, operand 2, single buffered']
    #allocation8 [shape = 'u8[16384]{0}', space=vmem, size = 0x4000, scoped, tag = 'input window, operand 3, single buffered']
    #allocation9 [shape = 's32[1]{0}', space=sflag, size = 0x4, scoped, tag = 'scoped memory for tpu_custom_call.1']
    #allocation10 [shape = 'u8[16384]{0}', space=vmem, size = 0x4000, scoped, tag = 'input window, operand 4, single buffered']
    #allocation11 [shape = 'u8[16384]{0}', space=vmem, size = 0x4000, scoped, tag = 'input window, operand 5, single buffered']
    #allocation12 [shape = 's32[1]{0}', space=sflag, size = 0x4, scoped, tag = 'scoped memory for tpu_custom_call.1']
    #allocation13 [shape = 'u8[16384]{0}', space=vmem, size = 0x4000, scoped, tag = 'input window, operand 6, single buffered']
    #allocation14 [shape = 'u8[16384]{0}', space=vmem, size = 0x4000, scoped, tag = 'input window, operand 7, single buffered']
    #allocation15 [shape = 's32[1]{0}', space=sflag, size = 0x4, scoped, tag = 'scoped memory for tpu_custom_call.1']
    #allocation16 [shape = 'u8[16384]{0}', space=vmem, size = 0x4000, scoped, tag = 'output window, operand 0, single buffered']
    #allocation17 [shape = 'u8[8192]{0}', space=vmem, size = 0x2000, scoped, tag = 'output window, operand 1, single buffered']
    #allocation18 [shape = 's32[1]{0}', space=sflag, size = 0x4, scoped, tag = 'scoped memory for tpu_custom_call.1']
    %15 = vsyncpa [#allocation3], 0
    %16 = vsyncpa [#allocation6], 0
    %17 = vsyncpa [#allocation9], 0
    %18 = vsyncpa [#allocation12], 0
    %19 = vsyncpa [#allocation15], 0
    %20 = vsyncpa [#allocation4], 0
    %21 = vsyncpa [#allocation18], 0
    // Predicated region
    $region2: #{tpu_custom_call.1} parent=1 // pred_check
      _
    $region3: #{tpu_custom_call.1} parent=1 // pred_check_branch
      %23 = sbr.rel (0) target = $region5
    $region4: #{tpu_custom_call.1} parent=1 // pred_region
      %25 = vsyncadd [#allocation3], 0
      %s26 = sshll.u32 %s0, 4
      %s27 = int_to_ptr.hbm [resolvable:$true] %s26
      %s28 = sshll.u32 [#allocation2], 4
      %s29 = int_to_ptr.vmem [resolvable:$true] %s28
      %34 = dma.hbm_to_vmem [thread:$0]  %s27, 512, %s29, [#allocation3], 128, 128, 8
    $region5: #{tpu_custom_call.1} parent=1 // pred_fallthru
      _
    // Predicated region
    $region6: #{tpu_custom_call.1} parent=1 // pred_check
      _
    $region7: #{tpu_custom_call.1} parent=1 // pred_check_branch
      %36 = sbr.rel (0) target = $region9
    $region8: #{tpu_custom_call.1} parent=1 // pred_region
      %38 = vsyncadd [#allocation6], 0
      %s39 = sshll.u32 %s1, 4
      %s40 = int_to_ptr.hbm [resolvable:$true] %s39
      %s41 = sshll.u32 [#allocation5], 4
      %s42 = int_to_ptr.vmem [resolvable:$true] %s41
      %47 = dma.hbm_to_vmem [thread:$0]  %s40, 256, %s42, [#allocation6], 128, 128, 8
    $region9: #{tpu_custom_call.1} parent=1 // pred_fallthru
      _
    // Predicated region
    $region10: #{tpu_custom_call.1} parent=1 // pred_check
      _
    $region11: #{tpu_custom_call.1} parent=1 // pred_check_branch
      %49 = sbr.rel (0) target = $region13
    $region12: #{tpu_custom_call.1} parent=1 // pred_region
      %51 = vsyncadd [#allocation6], 0
      %s52 = sshll.u32 %s2, 4
      %s53 = int_to_ptr.hbm [resolvable:$true] %s52
      %s54 = sshll.u32 [#allocation7], 4
      %s55 = int_to_ptr.vmem [resolvable:$true] %s54
      %60 = dma.hbm_to_vmem [thread:$0]  %s53, 32, %s55, [#allocation6], 16, 16, 1
    $region13: #{tpu_custom_call.1} parent=1 // pred_fallthru
      _
    // Predicated region
    $region14: #{tpu_custom_call.1} parent=1 // pred_check
      _
    $region15: #{tpu_custom_call.1} parent=1 // pred_check_branch
      %62 = sbr.rel (0) target = $region17
    $region16: #{tpu_custom_call.1} parent=1 // pred_region
      %64 = vsyncadd [#allocation9], 0
      %s65 = sshll.u32 %s3, 4
      %s66 = int_to_ptr.hbm [resolvable:$true] %s65
      %s67 = sshll.u32 [#allocation8], 4
      %s68 = int_to_ptr.vmem [resolvable:$true] %s67
      %73 = dma.hbm_to_vmem [thread:$0]  %s66, 512, %s68, [#allocation9], 128, 128, 8
    $region17: #{tpu_custom_call.1} parent=1 // pred_fallthru
      _
    // Predicated region
    $region18: #{tpu_custom_call.1} parent=1 // pred_check
      _
    $region19: #{tpu_custom_call.1} parent=1 // pred_check_branch
      %75 = sbr.rel (0) target = $region21
    $region20: #{tpu_custom_call.1} parent=1 // pred_region
      %77 = vsyncadd [#allocation9], 0
      %s78 = sshll.u32 %s4, 4
      %s79 = int_to_ptr.hbm [resolvable:$true] %s78
      %s80 = sshll.u32 [#allocation10], 4
      %s81 = int_to_ptr.vmem [resolvable:$true] %s80
      %86 = dma.hbm_to_vmem [thread:$0]  %s79, 512, %s81, [#allocation9], 128, 128, 8
    $region21: #{tpu_custom_call.1} parent=1 // pred_fallthru
      _
    // Predicated region
    $region22: #{tpu_custom_call.1} parent=1 // pred_check
      _
    $region23: #{tpu_custom_call.1} parent=1 // pred_check_branch
      %88 = sbr.rel (0) target = $region25
    $region24: #{tpu_custom_call.1} parent=1 // pred_region
      %90 = vsyncadd [#allocation12], 0
      %s91 = sshll.u32 %s5, 4
      %s92 = int_to_ptr.hbm [resolvable:$true] %s91
      %s93 = sshll.u32 [#allocation11], 4
      %s94 = int_to_ptr.vmem [resolvable:$true] %s93
      %99 = dma.hbm_to_vmem [thread:$0]  %s92, 512, %s94, [#allocation12], 128, 128, 8
    $region25: #{tpu_custom_call.1} parent=1 // pred_fallthru
      _
    // Predicated region
    $region26: #{tpu_custom_call.1} parent=1 // pred_check
      _
    $region27: #{tpu_custom_call.1} parent=1 // pred_check_branch
      %101 = sbr.rel (0) target = $region29
    $region28: #{tpu_custom_call.1} parent=1 // pred_region
      %103 = vsyncadd [#allocation12], 0
      %s104 = sshll.u32 %s6, 4
      %s105 = int_to_ptr.hbm [resolvable:$true] %s104
      %s106 = sshll.u32 [#allocation13], 4
      %s107 = int_to_ptr.vmem [resolvable:$true] %s106
      %112 = dma.hbm_to_vmem [thread:$0]  %s105, 512, %s107, [#allocation12], 128, 128, 8
    $region29: #{tpu_custom_call.1} parent=1 // pred_fallthru
      _
    // Predicated region
    $region30: #{tpu_custom_call.1} parent=1 // pred_check
      _
    $region31: #{tpu_custom_call.1} parent=1 // pred_check_branch
      %114 = sbr.rel (0) target = $region33
    $region32: #{tpu_custom_call.1} parent=1 // pred_region
      %116 = vsyncadd [#allocation15], 0
      %s117 = sshll.u32 %s7, 4
      %s118 = int_to_ptr.hbm [resolvable:$true] %s117
      %s119 = sshll.u32 [#allocation14], 4
      %s120 = int_to_ptr.vmem [resolvable:$true] %s119
      %125 = dma.hbm_to_vmem [thread:$0]  %s118, 512, %s120, [#allocation15], 128, 128, 8
    $region33: #{tpu_custom_call.1} parent=1 // pred_fallthru
      _
    // Predicated region
    $region34: #{tpu_custom_call.1} parent=1 // pred_check
      _
    $region35: #{tpu_custom_call.1} parent=1 // pred_check_branch
      %127 = sbr.rel (0) target = $region37
    $region36: #{tpu_custom_call.1} parent=1 // pred_region
      %129 = dma.done [#allocation3], 512
    $region37: #{tpu_custom_call.1} parent=1 // pred_fallthru
      _
    // Predicated region
    $region38: #{tpu_custom_call.1} parent=1 // pred_check
      _
    $region39: #{tpu_custom_call.1} parent=1 // pred_check_branch
      %131 = sbr.rel (0) target = $region41
    $region40: #{tpu_custom_call.1} parent=1 // pred_region
      %133 = dma.done [#allocation6], 256
    $region41: #{tpu_custom_call.1} parent=1 // pred_fallthru
      _
    // Predicated region
    $region42: #{tpu_custom_call.1} parent=1 // pred_check
      _
    $region43: #{tpu_custom_call.1} parent=1 // pred_check_branch
      %135 = sbr.rel (0) target = $region45
    $region44: #{tpu_custom_call.1} parent=1 // pred_region
      %137 = dma.done [#allocation6], 32
    $region45: #{tpu_custom_call.1} parent=1 // pred_fallthru
      _
    // Predicated region
    $region46: #{tpu_custom_call.1} parent=1 // pred_check
      _
    $region47: #{tpu_custom_call.1} parent=1 // pred_check_branch
      %139 = sbr.rel (0) target = $region49
    $region48: #{tpu_custom_call.1} parent=1 // pred_region
      %141 = dma.done [#allocation9], 512
    $region49: #{tpu_custom_call.1} parent=1 // pred_fallthru
      _
    // Predicated region
    $region50: #{tpu_custom_call.1} parent=1 // pred_check
      _
    $region51: #{tpu_custom_call.1} parent=1 // pred_check_branch
      %143 = sbr.rel (0) target = $region53
    $region52: #{tpu_custom_call.1} parent=1 // pred_region
      %145 = dma.done [#allocation9], 512
    $region53: #{tpu_custom_call.1} parent=1 // pred_fallthru
      _
    // Predicated region
    $region54: #{tpu_custom_call.1} parent=1 // pred_check
      _
    $region55: #{tpu_custom_call.1} parent=1 // pred_check_branch
      %147 = sbr.rel (0) target = $region57
    $region56: #{tpu_custom_call.1} parent=1 // pred_region
      %149 = dma.done [#allocation12], 512
    $region57: #{tpu_custom_call.1} parent=1 // pred_fallthru
      _
    // Predicated region
    $region58: #{tpu_custom_call.1} parent=1 // pred_check
      _
    $region59: #{tpu_custom_call.1} parent=1 // pred_check_branch
      %151 = sbr.rel (0) target = $region61
    $region60: #{tpu_custom_call.1} parent=1 // pred_region
      %153 = dma.done [#allocation12], 512
    $region61: #{tpu_custom_call.1} parent=1 // pred_fallthru
      _
    // Predicated region
    $region62: #{tpu_custom_call.1} parent=1 // pred_check
      _
    $region63: #{tpu_custom_call.1} parent=1 // pred_check_branch
      %155 = sbr.rel (0) target = $region65
    $region64: #{tpu_custom_call.1} parent=1 // pred_region
      %157 = dma.done [#allocation15], 512
    $region65: #{tpu_custom_call.1} parent=1 // pred_fallthru
      _
    %v158 = vld [vmem:[#allocation2] sm:$0xff]
    %v159 = vld [vmem:[#allocation2 + $0x8] sm:$0xff]
    %v160 = vld [vmem:[#allocation2 + $0x10] sm:$0xff]
    %v161 = vld [vmem:[#allocation2 + $0x18] sm:$0xff]
    %v162 = vld [vmem:[#allocation5] sm:$0xff]
    %v163 = vld [vmem:[#allocation5 + $0x8] sm:$0xff]
    %v164 = vld [vmem:[#allocation7] sm:$0x1]
    %v165 = vld [vmem:[#allocation7 + $0x1] sm:$0x1]
    %v166 = vsub.f32 1.0, %v164
    %v167 = vsub.f32 1.0, %v165
    %v168 = vmul.f32 %v166, -10000.0
    %v169 = vmul.f32 %v167, -10000.0
    %v170 = vmul.f32 %v166, -1e+09
    %v171 = vmul.f32 %v167, -1e+09
    %v172 = vld [vmem:[#allocation8] sm:$0xff]
    %v173 = vld [vmem:[#allocation8 + $0x8] sm:$0xff]
    %v174 = vld [vmem:[#allocation8 + $0x10] sm:$0xff]
    %v175 = vld [vmem:[#allocation8 + $0x18] sm:$0xff]
    %vm176 = vcmask 261120
    %v178 = vsel %vm176, %v158, 0
    %v181 = vsel %vm176, %v159, 0
    %v184 = vsel %vm176, %v160, 0
    %v187 = vsel %vm176, %v161, 0
    %189 = vmatpush.msra.mxu0 0.0
    %190 = vmatpush.msra.mxu0 0.0
    %191 = vmatpush.msra.mxu0 0.0
    %192 = vmatpush.msra.mxu0 0.0
    %193 = vmatpush.msra.mxu0 0.0
    %194 = vmatpush.msra.mxu0 0.0
    %195 = vmatpush.msra.mxu0 0.0
    %196 = vmatpush.msra.mxu0 0.0
    %197 = vmatpush.msra.mxu0 0.0
    %198 = vmatpush.msra.mxu0 0.0
    %199 = vmatpush.msra.mxu0 0.0
    %200 = vmatpush.msra.mxu0 0.0
    %201 = vmatpush.msra.mxu0 %v175
    %202 = vmatpush.msra.mxu0 %v174
    %203 = vmatpush.msra.mxu0 %v173
    %204 = vmatpush.msra.mxu0 %v172
    %205 = vmatmul.f32.gmra.mxu0 %v178
    %v206 = vpop.f32.mrf.mxu0
    %v207 = vadd.f32 0.0, %v206
    %208 = vmatmul.f32.gmra.mxu0 %v181
    %v209 = vpop.f32.mrf.mxu0
    %v210 = vadd.f32 0.0, %v209
    %211 = vmatmul.f32.gmra.mxu0 %v184
    %v212 = vpop.f32.mrf.mxu0
    %v213 = vadd.f32 0.0, %v212
    %214 = vmatmul.f32.gmra.mxu0 %v187
    %v215 = vpop.f32.mrf.mxu0
    %v216 = vadd.f32 0.0, %v215
    %217 = vdwg.mxu0
    %220 = vrot.lane.b32.xlu0 %v207, 96
    %v221 = vpop.permute.xlu0 %220
    %222 = vrot.lane.b32.xlu0 %v210, 96
    %v223 = vpop.permute.xlu0 %222
    %v224 = vsel %vm176, %v207, 0
    %v226 = vsel %vm176, %v210, 0
    %v228 = vsel %vm176, %v221, 0
    %v230 = vsel %vm176, %v223, 0
    %232 = vmatpush.xpose.msra.mxu0 0.0
    %233 = vmatpush.xpose.msra.mxu0 0.0
    %234 = vmatpush.xpose.msra.mxu0 0.0
    %235 = vmatpush.xpose.msra.mxu0 0.0
    %236 = vmatpush.xpose.msra.mxu0 0.0
    %237 = vmatpush.xpose.msra.mxu0 0.0
    %238 = vmatpush.xpose.msra.mxu0 0.0
    %239 = vmatpush.xpose.msra.mxu0 0.0
    %240 = vmatpush.xpose.msra.mxu0 0.0
    %241 = vmatpush.xpose.msra.mxu0 0.0
    %242 = vmatpush.xpose.msra.mxu0 0.0
    %243 = vmatpush.xpose.msra.mxu0 0.0
    %244 = vmatpush.xpose.msra.mxu0 0.0
    %245 = vmatpush.xpose.msra.mxu0 0.0
    %246 = vmatpush.xpose.msra.mxu0 %v230
    %247 = vmatpush.xpose.msra.mxu0 %v228
    %248 = vmatmul.f32.gmra.mxu0 %v224
    %v249 = vpop.f32.mrf.mxu0
    %v250 = vadd.f32 0.0, %v249
    %251 = vmatmul.f32.gmra.mxu0 %v226
    %v252 = vpop.f32.mrf.mxu0
    %v253 = vadd.f32 0.0, %v252
    %254 = vdwg.mxu0
    %257 = vrot.lane.b32.xlu0 %v213, 96
    %v258 = vpop.permute.xlu0 %257
    %259 = vrot.lane.b32.xlu0 %v216, 96
    %v260 = vpop.permute.xlu0 %259
    %v261 = vsel %vm176, %v213, 0
    %v263 = vsel %vm176, %v216, 0
    %v265 = vsel %vm176, %v258, 0
    %v267 = vsel %vm176, %v260, 0
    %269 = vmatpush.xpose.msra.mxu0 0.0
    %270 = vmatpush.xpose.msra.mxu0 0.0
    %271 = vmatpush.xpose.msra.mxu0 0.0
    %272 = vmatpush.xpose.msra.mxu0 0.0
    %273 = vmatpush.xpose.msra.mxu0 0.0
    %274 = vmatpush.xpose.msra.mxu0 0.0
    %275 = vmatpush.xpose.msra.mxu0 0.0
    %276 = vmatpush.xpose.msra.mxu0 0.0
    %277 = vmatpush.xpose.msra.mxu0 0.0
    %278 = vmatpush.xpose.msra.mxu0 0.0
    %279 = vmatpush.xpose.msra.mxu0 0.0
    %280 = vmatpush.xpose.msra.mxu0 0.0
    %281 = vmatpush.xpose.msra.mxu0 0.0
    %282 = vmatpush.xpose.msra.mxu0 0.0
    %283 = vmatpush.xpose.msra.mxu0 %v267
    %284 = vmatpush.xpose.msra.mxu0 %v265
    %285 = vmatmul.f32.gmra.mxu0 %v261
    %v286 = vpop.f32.mrf.mxu0
    %v287 = vadd.f32 0.0, %v286
    %288 = vmatmul.f32.gmra.mxu0 %v263
    %v289 = vpop.f32.mrf.mxu0
    %v290 = vadd.f32 0.0, %v289
    %291 = vdwg.mxu0
    %v292 = vmul.f32 %v250, 0.17677669
    %v293 = vmul.f32 %v253, 0.17677669
    %v294 = vmul.f32 %v287, 0.17677669
    %v295 = vmul.f32 %v290, 0.17677669
    %v298 = vperm.slane %v168, 0
    %v299 = vperm.slane %v169, 0
    %v302 = vadd.f32 %v292, %v298
    %v303 = vadd.f32 %v293, %v298
    %v304 = vadd.f32 %v294, %v299
    %v305 = vadd.f32 %v295, %v299
    %vm306 = vcmask 130048
    %v307 = vsel %vm306, %v302, -inf
    %308 = vmax.xlane.f32.xlu0 %v307
    %v309 = vpop.xlane.xlu0 %308
    %v310 = vsel %vm306, %v303, -inf
    %311 = vmax.xlane.f32.xlu0 %v310
    %v312 = vpop.xlane.xlu0 %311
    %v313 = vsel %vm306, %v304, -inf
    %314 = vmax.xlane.f32.xlu0 %v313
    %v315 = vpop.xlane.xlu0 %314
    %v316 = vsel %vm306, %v305, -inf
    %317 = vmax.xlane.f32.xlu0 %v316
    %v318 = vpop.xlane.xlu0 %317
    %v319 = vsub.f32 %v302, %v309
    %v320 = vsub.f32 %v303, %v312
    %v321 = vsub.f32 %v304, %v315
    %v322 = vsub.f32 %v305, %v318
    %v323 = vmul.f32 %v319, 1.442695
    %v324 = vpow.pop %v323
    %v325 = vmul.f32 %v320, 1.442695
    %v326 = vpow.pop %v325
    %v327 = vmul.f32 %v321, 1.442695
    %v328 = vpow.pop %v327
    %v329 = vmul.f32 %v322, 1.442695
    %v330 = vpow.pop %v329
    %v331 = vsel %vm306, %v324, 0.0
    %332 = vadd.xlane.f32.xlu0 %v331
    %v333 = vpop.xlane.xlu0 %332
    %v334 = vsel %vm306, %v326, 0.0
    %335 = vadd.xlane.f32.xlu0 %v334
    %v336 = vpop.xlane.xlu0 %335
    %v337 = vsel %vm306, %v328, 0.0
    %338 = vadd.xlane.f32.xlu0 %v337
    %v339 = vpop.xlane.xlu0 %338
    %v340 = vsel %vm306, %v330, 0.0
    %341 = vadd.xlane.f32.xlu0 %v340
    %v342 = vpop.xlane.xlu0 %341
    %v343 = vrcp.pop %v333
    %v344 = vrcp.pop %v336
    %v345 = vrcp.pop %v339
    %v346 = vrcp.pop %v342
    %v347 = vmul.f32 %v324, %v343
    %v348 = vmul.f32 %v326, %v344
    %v349 = vmul.f32 %v328, %v345
    %v350 = vmul.f32 %v330, %v346
    %351 = vst.msk [vmem:[#allocation16] sm:$0xff] %vm306, %v347
    %352 = vst.msk [vmem:[#allocation16 + $0x8] sm:$0xff] %vm306, %v348
    %353 = vst.msk [vmem:[#allocation16 + $0x10] sm:$0xff] %vm306, %v349
    %354 = vst.msk [vmem:[#allocation16 + $0x18] sm:$0xff] %vm306, %v350
    %355 = vrot.lane.b32.xlu0 %v207, 64
    %v356 = vpop.permute.xlu0 %355
    %357 = vrot.lane.b32.xlu0 %v210, 64
    %v358 = vpop.permute.xlu0 %357
    %v362 = vsel %vm306, %v347, 0
    %v365 = vsel %vm306, %v348, 0
    %367 = vmatpush.msra.mxu0 0.0
    %368 = vmatpush.msra.mxu0 0.0
    %369 = vmatpush.msra.mxu0 0.0
    %370 = vmatpush.msra.mxu0 0.0
    %371 = vmatpush.msra.mxu0 0.0
    %372 = vmatpush.msra.mxu0 0.0
    %373 = vmatpush.msra.mxu0 0.0
    %374 = vmatpush.msra.mxu0 0.0
    %375 = vmatpush.msra.mxu0 0.0
    %376 = vmatpush.msra.mxu0 0.0
    %377 = vmatpush.msra.mxu0 0.0
    %378 = vmatpush.msra.mxu0 0.0
    %379 = vmatpush.msra.mxu0 0.0
    %380 = vmatpush.msra.mxu0 0.0
    %381 = vmatpush.msra.mxu0 %v358
    %382 = vmatpush.msra.mxu0 %v356
    %383 = vmatmul.f32.gmra.mxu0 %v362
    %v384 = vpop.f32.mrf.mxu0
    %v385 = vadd.f32 0.0, %v384
    %386 = vmatmul.f32.gmra.mxu0 %v365
    %v387 = vpop.f32.mrf.mxu0
    %v388 = vadd.f32 0.0, %v387
    %389 = vdwg.mxu0
    %390 = vrot.lane.b32.xlu0 %v213, 64
    %v391 = vpop.permute.xlu0 %390
    %392 = vrot.lane.b32.xlu0 %v216, 64
    %v393 = vpop.permute.xlu0 %392
    %v397 = vsel %vm306, %v349, 0
    %v400 = vsel %vm306, %v350, 0
    %402 = vmatpush.msra.mxu0 0.0
    %403 = vmatpush.msra.mxu0 0.0
    %404 = vmatpush.msra.mxu0 0.0
    %405 = vmatpush.msra.mxu0 0.0
    %406 = vmatpush.msra.mxu0 0.0
    %407 = vmatpush.msra.mxu0 0.0
    %408 = vmatpush.msra.mxu0 0.0
    %409 = vmatpush.msra.mxu0 0.0
    %410 = vmatpush.msra.mxu0 0.0
    %411 = vmatpush.msra.mxu0 0.0
    %412 = vmatpush.msra.mxu0 0.0
    %413 = vmatpush.msra.mxu0 0.0
    %414 = vmatpush.msra.mxu0 0.0
    %415 = vmatpush.msra.mxu0 0.0
    %416 = vmatpush.msra.mxu0 %v393
    %417 = vmatpush.msra.mxu0 %v391
    %418 = vmatmul.f32.gmra.mxu0 %v397
    %v419 = vpop.f32.mrf.mxu0
    %v420 = vadd.f32 0.0, %v419
    %421 = vmatmul.f32.gmra.mxu0 %v400
    %v422 = vpop.f32.mrf.mxu0
    %v423 = vadd.f32 0.0, %v422
    %424 = vdwg.mxu0
    %v425 = vadd.f32 %v158, %v385
    %v426 = vadd.f32 %v159, %v388
    %v427 = vadd.f32 %v160, %v420
    %v428 = vadd.f32 %v161, %v423
    %v429 = vld [vmem:[#allocation10] sm:$0xff]
    %v430 = vld [vmem:[#allocation10 + $0x8] sm:$0xff]
    %v431 = vld [vmem:[#allocation10 + $0x10] sm:$0xff]
    %v432 = vld [vmem:[#allocation10 + $0x18] sm:$0xff]
    %v434 = vsel %vm176, %v162, 0
    %v437 = vsel %vm176, %v163, 0
    %439 = vmatpush.msra.mxu0 0.0
    %440 = vmatpush.msra.mxu0 0.0
    %441 = vmatpush.msra.mxu0 0.0
    %442 = vmatpush.msra.mxu0 0.0
    %443 = vmatpush.msra.mxu0 0.0
    %444 = vmatpush.msra.mxu0 0.0
    %445 = vmatpush.msra.mxu0 0.0
    %446 = vmatpush.msra.mxu0 0.0
    %447 = vmatpush.msra.mxu0 0.0
    %448 = vmatpush.msra.mxu0 0.0
    %449 = vmatpush.msra.mxu0 0.0
    %450 = vmatpush.msra.mxu0 0.0
    %451 = vmatpush.msra.mxu0 %v432
    %452 = vmatpush.msra.mxu0 %v431
    %453 = vmatpush.msra.mxu0 %v430
    %454 = vmatpush.msra.mxu0 %v429
    %455 = vmatmul.f32.gmra.mxu0 %v434
    %v456 = vpop.f32.mrf.mxu0
    %v457 = vadd.f32 0.0, %v456
    %458 = vmatmul.f32.gmra.mxu0 %v437
    %v459 = vpop.f32.mrf.mxu0
    %v460 = vadd.f32 0.0, %v459
    %461 = vdwg.mxu0
    %v462 = vlaneseq
    %v463 = vshrl.u32 %v462, 7
    %v464 = vlaneseq
    %v465 = vand.u32 %v464, 127
    %vm466 = vcmp.ge.s32.totalorder %v463, %v465
    %v467 = vsel %vm466, 0.0, -10000.0
    %469 = vrot.lane.b32.xlu0 %v457, 96
    %v470 = vpop.permute.xlu0 %469
    %v471 = vsel %vm176, %v457, 0
    %v473 = vsel %vm176, %v470, 0
    %475 = vmatpush.xpose.msra.mxu0 0.0
    %476 = vmatpush.xpose.msra.mxu0 0.0
    %477 = vmatpush.xpose.msra.mxu0 0.0
    %478 = vmatpush.xpose.msra.mxu0 0.0
    %479 = vmatpush.xpose.msra.mxu0 0.0
    %480 = vmatpush.xpose.msra.mxu0 0.0
    %481 = vmatpush.xpose.msra.mxu0 0.0
    %482 = vmatpush.xpose.msra.mxu0 0.0
    %483 = vmatpush.xpose.msra.mxu0 0.0
    %484 = vmatpush.xpose.msra.mxu0 0.0
    %485 = vmatpush.xpose.msra.mxu0 0.0
    %486 = vmatpush.xpose.msra.mxu0 0.0
    %487 = vmatpush.xpose.msra.mxu0 0.0
    %488 = vmatpush.xpose.msra.mxu0 0.0
    %489 = vmatpush.xpose.msra.mxu0 0.0
    %490 = vmatpush.xpose.msra.mxu0 %v473
    %491 = vmatmul.f32.gmra.mxu0 %v471
    %v492 = vpop.f32.mrf.mxu0
    %v493 = vadd.f32 0.0, %v492
    %494 = vdwg.mxu0
    %496 = vrot.lane.b32.xlu0 %v460, 96
    %v497 = vpop.permute.xlu0 %496
    %v498 = vsel %vm176, %v460, 0
    %v500 = vsel %vm176, %v497, 0
    %502 = vmatpush.xpose.msra.mxu0 0.0
    %503 = vmatpush.xpose.msra.mxu0 0.0
    %504 = vmatpush.xpose.msra.mxu0 0.0
    %505 = vmatpush.xpose.msra.mxu0 0.0
    %506 = vmatpush.xpose.msra.mxu0 0.0
    %507 = vmatpush.xpose.msra.mxu0 0.0
    %508 = vmatpush.xpose.msra.mxu0 0.0
    %509 = vmatpush.xpose.msra.mxu0 0.0
    %510 = vmatpush.xpose.msra.mxu0 0.0
    %511 = vmatpush.xpose.msra.mxu0 0.0
    %512 = vmatpush.xpose.msra.mxu0 0.0
    %513 = vmatpush.xpose.msra.mxu0 0.0
    %514 = vmatpush.xpose.msra.mxu0 0.0
    %515 = vmatpush.xpose.msra.mxu0 0.0
    %516 = vmatpush.xpose.msra.mxu0 0.0
    %517 = vmatpush.xpose.msra.mxu0 %v500
    %518 = vmatmul.f32.gmra.mxu0 %v498
    %v519 = vpop.f32.mrf.mxu0
    %v520 = vadd.f32 0.0, %v519
    %521 = vdwg.mxu0
    %v522 = vmul.f32 %v493, 0.17677669
    %v523 = vmul.f32 %v520, 0.17677669
    %v524 = vadd.f32 %v522, %v467
    %v525 = vadd.f32 %v523, %v467
    %vm526 = vcmask 64512
    %v527 = vsel %vm526, %v524, -inf
    %528 = vmax.xlane.f32.xlu0 %v527
    %v529 = vpop.xlane.xlu0 %528
    %v530 = vsel %vm526, %v525, -inf
    %531 = vmax.xlane.f32.xlu0 %v530
    %v532 = vpop.xlane.xlu0 %531
    %v533 = vsub.f32 %v524, %v529
    %v534 = vsub.f32 %v525, %v532
    %v535 = vmul.f32 %v533, 1.442695
    %v536 = vpow.pop %v535
    %v537 = vmul.f32 %v534, 1.442695
    %v538 = vpow.pop %v537
    %v539 = vsel %vm526, %v536, 0.0
    %540 = vadd.xlane.f32.xlu0 %v539
    %v541 = vpop.xlane.xlu0 %540
    %v542 = vsel %vm526, %v538, 0.0
    %543 = vadd.xlane.f32.xlu0 %v542
    %v544 = vpop.xlane.xlu0 %543
    %v545 = vrcp.pop %v541
    %v546 = vrcp.pop %v544
    %v547 = vmul.f32 %v536, %v545
    %v548 = vmul.f32 %v538, %v546
    %549 = vrot.lane.b32.xlu0 %v457, 64
    %v550 = vpop.permute.xlu0 %549
    %v553 = vsel %vm526, %v547, 0
    %555 = vmatpush.msra.mxu0 0.0
    %556 = vmatpush.msra.mxu0 0.0
    %557 = vmatpush.msra.mxu0 0.0
    %558 = vmatpush.msra.mxu0 0.0
    %559 = vmatpush.msra.mxu0 0.0
    %560 = vmatpush.msra.mxu0 0.0
    %561 = vmatpush.msra.mxu0 0.0
    %562 = vmatpush.msra.mxu0 0.0
    %563 = vmatpush.msra.mxu0 0.0
    %564 = vmatpush.msra.mxu0 0.0
    %565 = vmatpush.msra.mxu0 0.0
    %566 = vmatpush.msra.mxu0 0.0
    %567 = vmatpush.msra.mxu0 0.0
    %568 = vmatpush.msra.mxu0 0.0
    %569 = vmatpush.msra.mxu0 0.0
    %570 = vmatpush.msra.mxu0 %v550
    %571 = vmatmul.f32.gmra.mxu0 %v553
    %v572 = vpop.f32.mrf.mxu0
    %v573 = vadd.f32 0.0, %v572
    %574 = vdwg.mxu0
    %575 = vrot.lane.b32.xlu0 %v460, 64
    %v576 = vpop.permute.xlu0 %575
    %v579 = vsel %vm526, %v548, 0
    %581 = vmatpush.msra.mxu0 0.0
    %582 = vmatpush.msra.mxu0 0.0
    %583 = vmatpush.msra.mxu0 0.0
    %584 = vmatpush.msra.mxu0 0.0
    %585 = vmatpush.msra.mxu0 0.0
    %586 = vmatpush.msra.mxu0 0.0
    %587 = vmatpush.msra.mxu0 0.0
    %588 = vmatpush.msra.mxu0 0.0
    %589 = vmatpush.msra.mxu0 0.0
    %590 = vmatpush.msra.mxu0 0.0
    %591 = vmatpush.msra.mxu0 0.0
    %592 = vmatpush.msra.mxu0 0.0
    %593 = vmatpush.msra.mxu0 0.0
    %594 = vmatpush.msra.mxu0 0.0
    %595 = vmatpush.msra.mxu0 0.0
    %596 = vmatpush.msra.mxu0 %v576
    %597 = vmatmul.f32.gmra.mxu0 %v579
    %v598 = vpop.f32.mrf.mxu0
    %v599 = vadd.f32 0.0, %v598
    %600 = vdwg.mxu0
    %v601 = vadd.f32 %v162, %v573
    %v602 = vadd.f32 %v163, %v599
    %v603 = vld [vmem:[#allocation11] sm:$0xff]
    %v604 = vld [vmem:[#allocation11 + $0x8] sm:$0xff]
    %v605 = vld [vmem:[#allocation11 + $0x10] sm:$0xff]
    %v606 = vld [vmem:[#allocation11 + $0x18] sm:$0xff]
    %v608 = vsel %vm176, %v601, 0
    %v611 = vsel %vm176, %v602, 0
    %613 = vmatpush.msra.mxu0 0.0
    %614 = vmatpush.msra.mxu0 0.0
    %615 = vmatpush.msra.mxu0 0.0
    %616 = vmatpush.msra.mxu0 0.0
    %617 = vmatpush.msra.mxu0 0.0
    %618 = vmatpush.msra.mxu0 0.0
    %619 = vmatpush.msra.mxu0 0.0
    %620 = vmatpush.msra.mxu0 0.0
    %621 = vmatpush.msra.mxu0 0.0
    %622 = vmatpush.msra.mxu0 0.0
    %623 = vmatpush.msra.mxu0 0.0
    %624 = vmatpush.msra.mxu0 0.0
    %625 = vmatpush.msra.mxu0 %v606
    %626 = vmatpush.msra.mxu0 %v605
    %627 = vmatpush.msra.mxu0 %v604
    %628 = vmatpush.msra.mxu0 %v603
    %629 = vmatmul.f32.gmra.mxu0 %v608
    %v630 = vpop.f32.mrf.mxu0
    %v631 = vadd.f32 0.0, %v630
    %632 = vmatmul.f32.gmra.mxu0 %v611
    %v633 = vpop.f32.mrf.mxu0
    %v634 = vadd.f32 0.0, %v633
    %635 = vdwg.mxu0
    %v636 = vld [vmem:[#allocation13] sm:$0xff]
    %v637 = vld [vmem:[#allocation13 + $0x8] sm:$0xff]
    %v638 = vld [vmem:[#allocation13 + $0x10] sm:$0xff]
    %v639 = vld [vmem:[#allocation13 + $0x18] sm:$0xff]
    %v641 = vsel %vm176, %v425, 0
    %v644 = vsel %vm176, %v426, 0
    %v647 = vsel %vm176, %v427, 0
    %v650 = vsel %vm176, %v428, 0
    %652 = vmatpush.msra.mxu0 0.0
    %653 = vmatpush.msra.mxu0 0.0
    %654 = vmatpush.msra.mxu0 0.0
    %655 = vmatpush.msra.mxu0 0.0
    %656 = vmatpush.msra.mxu0 0.0
    %657 = vmatpush.msra.mxu0 0.0
    %658 = vmatpush.msra.mxu0 0.0
    %659 = vmatpush.msra.mxu0 0.0
    %660 = vmatpush.msra.mxu0 0.0
    %661 = vmatpush.msra.mxu0 0.0
    %662 = vmatpush.msra.mxu0 0.0
    %663 = vmatpush.msra.mxu0 0.0
    %664 = vmatpush.msra.mxu0 %v639
    %665 = vmatpush.msra.mxu0 %v638
    %666 = vmatpush.msra.mxu0 %v637
    %667 = vmatpush.msra.mxu0 %v636
    %668 = vmatmul.f32.gmra.mxu0 %v641
    %v669 = vpop.f32.mrf.mxu0
    %v670 = vadd.f32 0.0, %v669
    %671 = vmatmul.f32.gmra.mxu0 %v644
    %v672 = vpop.f32.mrf.mxu0
    %v673 = vadd.f32 0.0, %v672
    %674 = vmatmul.f32.gmra.mxu0 %v647
    %v675 = vpop.f32.mrf.mxu0
    %v676 = vadd.f32 0.0, %v675
    %677 = vmatmul.f32.gmra.mxu0 %v650
    %v678 = vpop.f32.mrf.mxu0
    %v679 = vadd.f32 0.0, %v678
    %680 = vdwg.mxu0
    %v682 = vsel %vm176, %v631, 0
    %v685 = vsel %vm176, %v670, 0
    %v688 = vsel %vm176, %v673, 0
    %690 = vmatpush.xpose.msra.mxu0 0.0
    %691 = vmatpush.xpose.msra.mxu0 0.0
    %692 = vmatpush.xpose.msra.mxu0 0.0
    %693 = vmatpush.xpose.msra.mxu0 0.0
    %694 = vmatpush.xpose.msra.mxu0 0.0
    %695 = vmatpush.xpose.msra.mxu0 0.0
    %696 = vmatpush.xpose.msra.mxu0 0.0
    %697 = vmatpush.xpose.msra.mxu0 0.0
    %698 = vmatpush.xpose.msra.mxu0 0.0
    %699 = vmatpush.xpose.msra.mxu0 0.0
    %700 = vmatpush.xpose.msra.mxu0 0.0
    %701 = vmatpush.xpose.msra.mxu0 0.0
    %702 = vmatpush.xpose.msra.mxu0 0.0
    %703 = vmatpush.xpose.msra.mxu0 0.0
    %704 = vmatpush.xpose.msra.mxu0 %v688
    %705 = vmatpush.xpose.msra.mxu0 %v685
    %706 = vmatmul.f32.gmra.mxu0 %v682
    %v707 = vpop.f32.mrf.mxu0
    %v708 = vadd.f32 0.0, %v707
    %709 = vdwg.mxu0
    %v711 = vsel %vm176, %v634, 0
    %v714 = vsel %vm176, %v676, 0
    %v717 = vsel %vm176, %v679, 0
    %719 = vmatpush.xpose.msra.mxu0 0.0
    %720 = vmatpush.xpose.msra.mxu0 0.0
    %721 = vmatpush.xpose.msra.mxu0 0.0
    %722 = vmatpush.xpose.msra.mxu0 0.0
    %723 = vmatpush.xpose.msra.mxu0 0.0
    %724 = vmatpush.xpose.msra.mxu0 0.0
    %725 = vmatpush.xpose.msra.mxu0 0.0
    %726 = vmatpush.xpose.msra.mxu0 0.0
    %727 = vmatpush.xpose.msra.mxu0 0.0
    %728 = vmatpush.xpose.msra.mxu0 0.0
    %729 = vmatpush.xpose.msra.mxu0 0.0
    %730 = vmatpush.xpose.msra.mxu0 0.0
    %731 = vmatpush.xpose.msra.mxu0 0.0
    %732 = vmatpush.xpose.msra.mxu0 0.0
    %733 = vmatpush.xpose.msra.mxu0 %v717
    %734 = vmatpush.xpose.msra.mxu0 %v714
    %735 = vmatmul.f32.gmra.mxu0 %v711
    %v736 = vpop.f32.mrf.mxu0
    %v737 = vadd.f32 0.0, %v736
    %738 = vdwg.mxu0
    %v739 = vmul.f32 %v708, 0.17677669
    %v740 = vmul.f32 %v737, 0.17677669
    %v743 = vperm.slane %v170, 0
    %v744 = vperm.slane %v171, 0
    %v747 = vadd.f32 %v739, %v743
    %v748 = vadd.f32 %v740, %v744
    %v749 = vsel %vm306, %v747, -inf
    %750 = vmax.xlane.f32.xlu0 %v749
    %v751 = vpop.xlane.xlu0 %750
    %v752 = vsel %vm306, %v748, -inf
    %753 = vmax.xlane.f32.xlu0 %v752
    %v754 = vpop.xlane.xlu0 %753
    %v755 = vsub.f32 %v747, %v751
    %v756 = vsub.f32 %v748, %v754
    %v757 = vmul.f32 %v755, 1.442695
    %v758 = vpow.pop %v757
    %v759 = vmul.f32 %v756, 1.442695
    %v760 = vpow.pop %v759
    %v761 = vsel %vm306, %v758, 0.0
    %762 = vadd.xlane.f32.xlu0 %v761
    %v763 = vpop.xlane.xlu0 %762
    %v764 = vsel %vm306, %v760, 0.0
    %765 = vadd.xlane.f32.xlu0 %v764
    %v766 = vpop.xlane.xlu0 %765
    %v767 = vrcp.pop %v763
    %v768 = vrcp.pop %v766
    %v769 = vmul.f32 %v758, %v767
    %v770 = vmul.f32 %v760, %v768
    %771 = vrot.lane.b32.xlu0 %v670, 96
    %v772 = vpop.permute.xlu0 %771
    %773 = vrot.lane.b32.xlu0 %v673, 96
    %v774 = vpop.permute.xlu0 %773
    %v778 = vsel %vm306, %v769, 0
    %780 = vmatpush.msra.mxu0 0.0
    %781 = vmatpush.msra.mxu0 0.0
    %782 = vmatpush.msra.mxu0 0.0
    %783 = vmatpush.msra.mxu0 0.0
    %784 = vmatpush.msra.mxu0 0.0
    %785 = vmatpush.msra.mxu0 0.0
    %786 = vmatpush.msra.mxu0 0.0
    %787 = vmatpush.msra.mxu0 0.0
    %788 = vmatpush.msra.mxu0 0.0
    %789 = vmatpush.msra.mxu0 0.0
    %790 = vmatpush.msra.mxu0 0.0
    %791 = vmatpush.msra.mxu0 0.0
    %792 = vmatpush.msra.mxu0 0.0
    %793 = vmatpush.msra.mxu0 0.0
    %794 = vmatpush.msra.mxu0 %v774
    %795 = vmatpush.msra.mxu0 %v772
    %796 = vmatmul.f32.gmra.mxu0 %v778
    %v797 = vpop.f32.mrf.mxu0
    %v798 = vadd.f32 0.0, %v797
    %799 = vdwg.mxu0
    %800 = vrot.lane.b32.xlu0 %v676, 96
    %v801 = vpop.permute.xlu0 %800
    %802 = vrot.lane.b32.xlu0 %v679, 96
    %v803 = vpop.permute.xlu0 %802
    %v807 = vsel %vm306, %v770, 0
    %809 = vmatpush.msra.mxu0 0.0
    %810 = vmatpush.msra.mxu0 0.0
    %811 = vmatpush.msra.mxu0 0.0
    %812 = vmatpush.msra.mxu0 0.0
    %813 = vmatpush.msra.mxu0 0.0
    %814 = vmatpush.msra.mxu0 0.0
    %815 = vmatpush.msra.mxu0 0.0
    %816 = vmatpush.msra.mxu0 0.0
    %817 = vmatpush.msra.mxu0 0.0
    %818 = vmatpush.msra.mxu0 0.0
    %819 = vmatpush.msra.mxu0 0.0
    %820 = vmatpush.msra.mxu0 0.0
    %821 = vmatpush.msra.mxu0 0.0
    %822 = vmatpush.msra.mxu0 0.0
    %823 = vmatpush.msra.mxu0 %v803
    %824 = vmatpush.msra.mxu0 %v801
    %825 = vmatmul.f32.gmra.mxu0 %v807
    %v826 = vpop.f32.mrf.mxu0
    %v827 = vadd.f32 0.0, %v826
    %828 = vdwg.mxu0
    %v829 = vadd.f32 %v601, %v798
    %v830 = vadd.f32 %v602, %v827
    %v831 = vld [vmem:[#allocation14] sm:$0xff]
    %v832 = vld [vmem:[#allocation14 + $0x8] sm:$0xff]
    %v833 = vld [vmem:[#allocation14 + $0x10] sm:$0xff]
    %v834 = vld [vmem:[#allocation14 + $0x18] sm:$0xff]
    %v836 = vsel %vm176, %v829, 0
    %v839 = vsel %vm176, %v830, 0
    %841 = vmatpush.msra.mxu0 0.0
    %842 = vmatpush.msra.mxu0 0.0
    %843 = vmatpush.msra.mxu0 0.0
    %844 = vmatpush.msra.mxu0 0.0
    %845 = vmatpush.msra.mxu0 0.0
    %846 = vmatpush.msra.mxu0 0.0
    %847 = vmatpush.msra.mxu0 0.0
    %848 = vmatpush.msra.mxu0 0.0
    %849 = vmatpush.msra.mxu0 0.0
    %850 = vmatpush.msra.mxu0 0.0
    %851 = vmatpush.msra.mxu0 0.0
    %852 = vmatpush.msra.mxu0 0.0
    %853 = vmatpush.msra.mxu0 %v834
    %854 = vmatpush.msra.mxu0 %v833
    %855 = vmatpush.msra.mxu0 %v832
    %856 = vmatpush.msra.mxu0 %v831
    %857 = vmatmul.f32.gmra.mxu0 %v836
    %v858 = vpop.f32.mrf.mxu0
    %v859 = vadd.f32 0.0, %v858
    %860 = vmatmul.f32.gmra.mxu0 %v839
    %v861 = vpop.f32.mrf.mxu0
    %v862 = vadd.f32 0.0, %v861
    %863 = vdwg.mxu0
    %864 = vst.msk [vmem:[#allocation17] sm:$0xff] %vm176, %v859
    %865 = vst.msk [vmem:[#allocation17 + $0x8] sm:$0xff] %vm176, %v862
    // Predicated region
    $region66: #{tpu_custom_call.1} parent=1 // pred_check
      _
    $region67: #{tpu_custom_call.1} parent=1 // pred_check_branch
      %867 = sbr.rel (0) target = $region69
    $region68: #{tpu_custom_call.1} parent=1 // pred_region
      %869 = vsyncadd [#allocation4], 0
      %s870 = sshll.u32 [#allocation16], 4
      %s871 = int_to_ptr.vmem [resolvable:$true] %s870
      %s872 = sshll.u32 %s8, 4
      %s873 = int_to_ptr.hbm [resolvable:$true] %s872
      %878 = dma.vmem_to_hbm [thread:$0]  %s871, 512, %s873, [#allocation4], 128, 128, 8
    $region69: #{tpu_custom_call.1} parent=1 // pred_fallthru
      _
    // Predicated region
    $region70: #{tpu_custom_call.1} parent=1 // pred_check
      _
    $region71: #{tpu_custom_call.1} parent=1 // pred_check_branch
      %880 = sbr.rel (0) target = $region73
    $region72: #{tpu_custom_call.1} parent=1 // pred_region
      %882 = vsyncadd [#allocation18], 0
      %s883 = sshll.u32 [#allocation17], 4
      %s884 = int_to_ptr.vmem [resolvable:$true] %s883
      %s885 = sshll.u32 %s9, 4
      %s886 = int_to_ptr.hbm [resolvable:$true] %s885
      %891 = dma.vmem_to_hbm [thread:$0]  %s884, 256, %s886, [#allocation18], 128, 128, 8
    $region73: #{tpu_custom_call.1} parent=1 // pred_fallthru
      _
    // Predicated region
    $region74: #{tpu_custom_call.1} parent=1 // pred_check
      _
    $region75: #{tpu_custom_call.1} parent=1 // pred_check_branch
      %893 = sbr.rel (0) target = $region77
    $region76: #{tpu_custom_call.1} parent=1 // pred_region
      %895 = dma.done [#allocation4], 512
    $region77: #{tpu_custom_call.1} parent=1 // pred_fallthru
      _
    // Predicated region
    $region78: #{tpu_custom_call.1} parent=1 // pred_check
      _
    $region79: #{tpu_custom_call.1} parent=1 // pred_check_branch
      %897 = sbr.rel (0) target = $region81
    $region80: #{tpu_custom_call.1} parent=1 // pred_region
      %899 = dma.done [#allocation18], 256
    $region81: #{tpu_custom_call.1} parent=1 // pred_fallthru
      _
    %900 = vsyncpa [#allocation3], 1
    %901 = vsyncpa [#allocation6], 1
    %902 = vsyncpa [#allocation9], 1
    %903 = vsyncpa [#allocation12], 1
    %904 = vsyncpa [#allocation15], 1
    %905 = vsyncpa [#allocation4], 1
    %906 = vsyncpa [#allocation18], 1

</llo_original>
